<compile_context>
chip_gen: v6e
topology: v6e:2x2x1
jax: 0.10.0
libtpu: 0.0.40
codegen_flags: <defaults>
</compile_context>

<pallas_src>
import jax
import jax.numpy as jnp
from jax.experimental import pallas as pl
from jax.experimental.pallas import tpu as pltpu


def _interp_matrix(n_in: int, n_out: int) -> jnp.ndarray:
    """M (n_out, n_in) s.t. y = M @ x reproduces F.interpolate(mode='bilinear',
    align_corners=True) along one axis."""
    if n_out == 1:
        return jnp.zeros((1, n_in), jnp.float32).at[0, 0].set(1.0)
    if n_in == 1:
        return jnp.ones((n_out, 1), jnp.float32)
    src = jnp.arange(n_out, dtype=jnp.float32) * (n_in - 1) / (n_out - 1)
    i0 = jnp.clip(jnp.floor(src).astype(jnp.int32), 0, n_in - 1)
    i1 = jnp.clip(i0 + 1, 0, n_in - 1)
    frac = src - i0.astype(jnp.float32)
    rows = jnp.arange(n_out)
    m = jnp.zeros((n_out, n_in), jnp.float32)
    m = m.at[rows, i0].add(1.0 - frac)
    m = m.at[rows, i1].add(frac)
    return m


def _vmem_capacity() -> int:
    try:
        return int(pltpu.get_tpu_info().vmem_capacity_bytes)
    except Exception:
        return 64 << 20          # conservative fallback (v7x per-core VMEM)


def _choose_rb(R: int) -> int:
    """(b, c_out) channel-images per grid step; kept <=8 so the unrolled in-kernel
    loop stays short."""
    for rb in range(min(R, 8), 0, -1):
        if R % rb == 0:
            return rb
    return 1


def _choose_th(Ho: int, Wo: int, RB: int) -> int:
    """Output-row band height: divisor of Ho, multiple of 8, output block under a
    generation-aware VMEM cap, preferring >=4 grid steps (pipelining + megacore)."""
    cap = min(8 << 20, _vmem_capacity() // 8)          # per double-buffered output block
    max_th = max(8, cap // max(1, RB * Wo * 4))
    cands = [d for d in range(8, Ho + 1, 8) if Ho % d == 0] or [Ho]
    for min_steps in (4, 2, 1):
        ok = [d for d in cands if d <= max_th and Ho // d >= min_steps]
        if ok:
            return max(ok)
    return min(cands)


def _upsample_kernel(y_ref, rh_ref, rwt_ref, o_ref):
    # y_ref  : (RB, H, W)   conv + bias already applied (f32), resident across the band loop
    # rh_ref : (TH, H)      rows of the H-interp matrix for this output band
    # rwt_ref: (W, Wo)      W-interp matrix (transposed), grid-invariant
    # o_ref  : (RB, TH, Wo) output band for these RB channel-images
    rh = rh_ref[...]
    rwt = rwt_ref[...]
    for rr in range(y_ref.shape[0]):                       # RB <= 8, static -> unrolled
        u = jnp.dot(rh, y_ref[rr], preferred_element_type=jnp.float32)        # (TH, W)
        o_ref[rr] = jnp.dot(u, rwt, preferred_element_type=jnp.float32).astype(o_ref.dtype)


def out_conv(x, weight, bias):
    """x: (B, C_in, H, W); weight: (C_out, C_in); bias: (C_out,).
    Returns (B, C_out, 4H, 4W), matching _OutConv.forward."""
    B, C_in, H, W = x.shape
    C_out = weight.shape[0]
    Ho, Wo = 4 * H, 4 * W

    x32 = x.astype(jnp.float32)
    w32 = weight.astype(jnp.float32)
    b32 = bias.astype(jnp.float32)

    # Hoisted 1x1 conv + bias (both commute with the align_corners bilinear upsample,
    # whose interpolation weights sum to 1): one tiny XLA einsum on the SMALL grid.
    y = jnp.einsum('oc,bchw->bohw', w32, x32) + b32[None, :, None, None]
    R = B * C_out
    y3 = y.reshape(R, H, W)                                # free contiguous reshape

    rh = _interp_matrix(H, Ho)                             # (Ho, H), ~KiB
    rwt = _interp_matrix(W, Wo).T                          # (W, Wo), ~KiB

    RB = _choose_rb(R)
    TH = _choose_th(Ho, Wo, RB)
    grid = (R // RB, Ho // TH)                             # band axis innermost: y fetched once per r

    out3 = pl.pallas_call(
        _upsample_kernel,
        out_shape=jax.ShapeDtypeStruct((R, Ho, Wo), jnp.float32),
        grid=grid,
        in_specs=[
            pl.BlockSpec((RB, H, W), lambda r, i: (r, 0, 0)),
            pl.BlockSpec((TH, H), lambda r, i: (i, 0)),
            pl.BlockSpec((W, Wo), lambda r, i: (0, 0)),
        ],
        out_specs=pl.BlockSpec((RB, TH, Wo), lambda r, i: (r, i, 0)),
        compiler_params=pltpu.CompilerParams(
            dimension_semantics=("parallel", "parallel"),
            vmem_limit_bytes=min(64 << 20, _vmem_capacity() // 2),
        ),
    )(y3, rh, rwt)

    # (B*C_out, Ho, Wo) row-major has the same HBM layout as (B, C_out, Ho, Wo): free reshape.
    return out3.reshape(B, C_out, Ho, Wo)


def out_conv_ref(x, weight, bias):
    """Pure-JAX reference in the ORIGINAL op order (upsample, then 1x1 conv + bias)."""
    B, C_in, H, W = x.shape
    Ho, Wo = 4 * H, 4 * W
    rh = _interp_matrix(H, Ho)
    rw = _interp_matrix(W, Wo)
    up = jnp.einsum('ph,bchw,qw->bcpq', rh, x.astype(jnp.float32), rw)
    return jnp.einsum('oc,bcpq->bopq', weight, up) + bias[None, :, None, None]


if __name__ == "__main__":
    key = jax.random.PRNGKey(0)
    k_x, k_w, k_b = jax.random.split(key, 3)

    B, C_in, C_out, H, W = 2, 4, 3, 16, 16
    x = jax.random.normal(k_x, (B, C_in, H, W), dtype=jnp.float32)

    # nn.Conv2d(C_in, C_out, kernel_size=1) parameter shapes: weight (C_out, C_in), bias (C_out,)
    fan_in = C_in
    bound = 1.0 / (fan_in ** 0.5)
    weight = jax.random.uniform(k_w, (C_out, C_in), jnp.float32, -bound, bound)
    bias = jax.random.uniform(k_b, (C_out,), jnp.float32, -bound, bound)

    out = out_conv(x, weight, bias)
    out = jax.block_until_ready(out)

    ref = out_conv_ref(x, weight, bias)
    assert out.shape == (B, C_out, 4 * H, 4 * W), out.shape
    assert jnp.allclose(out, ref, atol=1e-4, rtol=1e-4), "mismatch vs reference"

    print("KERNEL_OK")
</pallas_src>

<mosaic_0001>
module attributes {stable_mosaic.version = 11 : i64} {
  func.func @_upsample_kernel(%arg0: i32, %arg1: i32, %arg2: memref<6x16x16xf32, #tpu.memory_space<vmem>>, %arg3: memref<16x16xf32, #tpu.memory_space<vmem>>, %arg4: memref<16x64xf32, #tpu.memory_space<vmem>>, %arg5: memref<6x16x64xf32, #tpu.memory_space<vmem>>) attributes {dimension_semantics = [#tpu.dimension_semantics<parallel>, #tpu.dimension_semantics<parallel>], iteration_bounds = array<i64: 1, 4>, scalar_prefetch = 0 : i64, scratch_operands = 0 : i64, tpu.core_type = #tpu.core_type<tc>, window_params = [{transform_indices = @transform_0, window_bounds = array<i64: 6, 16, 16>}, {transform_indices = @transform_1, window_bounds = array<i64: 16, 16>}, {pipeline_mode = #tpu.pipeline_mode<synchronous>, transform_indices = @transform_2, window_bounds = array<i64: 16, 64>}, {transform_indices = @transform_3, window_bounds = array<i64: 6, 16, 64>}]} {
    %c0 = arith.constant 0 : index
    %c0_0 = arith.constant 0 : index
    %0 = vector.load %arg3[%c0, %c0_0] : memref<16x16xf32, #tpu.memory_space<vmem>>, vector<16x16xf32>
    %c0_1 = arith.constant 0 : index
    %c0_2 = arith.constant 0 : index
    %1 = vector.load %arg4[%c0_1, %c0_2] : memref<16x64xf32, #tpu.memory_space<vmem>>, vector<16x64xf32>
    %c0_3 = arith.constant 0 : index
    %c0_4 = arith.constant 0 : index
    %c0_5 = arith.constant 0 : index
    %2 = vector.load %arg2[%c0_3, %c0_4, %c0_5] : memref<6x16x16xf32, #tpu.memory_space<vmem>>, vector<1x16x16xf32>
    %3 = vector.shape_cast %2 : vector<1x16x16xf32> to vector<16x16xf32>
    %cst = arith.constant dense<0.000000e+00> : vector<16x16xf32>
    %4 = tpu.matmul %0, %3, %cst {dimension_numbers = #tpu.dot_dimension_numbers<[1], [0], [0], [1], [0, 0, 1, 1], [], []>} : vector<16x16xf32>, vector<16x16xf32>, vector<16x16xf32> -> vector<16x16xf32>
    %cst_6 = arith.constant dense<0.000000e+00> : vector<16x64xf32>
    %5 = tpu.matmul %4, %1, %cst_6 {dimension_numbers = #tpu.dot_dimension_numbers<[1], [0], [0], [1], [0, 0, 1, 1], [], []>} : vector<16x16xf32>, vector<16x64xf32>, vector<16x64xf32> -> vector<16x64xf32>
    %c0_7 = arith.constant 0 : index
    %c0_8 = arith.constant 0 : index
    %c0_9 = arith.constant 0 : index
    %6 = vector.load %arg5[%c0_7, %c0_8, %c0_9] : memref<6x16x64xf32, #tpu.memory_space<vmem>>, vector<1x16x64xf32>
    %7 = vector.shape_cast %6 : vector<1x16x64xf32> to vector<16x64xf32>
    %8 = vector.shape_cast %5 : vector<16x64xf32> to vector<1x16x64xf32>
    tpu.vector_store %arg5[%c0_7, %c0_8, %c0_9], %8 {strides = array<i32>} : memref<6x16x64xf32, #tpu.memory_space<vmem>>, vector<1x16x64xf32>,
    %c1 = arith.constant 1 : index
    %c0_10 = arith.constant 0 : index
    %c0_11 = arith.constant 0 : index
    %9 = vector.load %arg2[%c1, %c0_10, %c0_11] : memref<6x16x16xf32, #tpu.memory_space<vmem>>, vector<1x16x16xf32>
    %10 = vector.shape_cast %9 : vector<1x16x16xf32> to vector<16x16xf32>
    %cst_12 = arith.constant dense<0.000000e+00> : vector<16x16xf32>
    %11 = tpu.matmul %0, %10, %cst_12 {dimension_numbers = #tpu.dot_dimension_numbers<[1], [0], [0], [1], [0, 0, 1, 1], [], []>} : vector<16x16xf32>, vector<16x16xf32>, vector<16x16xf32> -> vector<16x16xf32>
    %cst_13 = arith.constant dense<0.000000e+00> : vector<16x64xf32>
    %12 = tpu.matmul %11, %1, %cst_13 {dimension_numbers = #tpu.dot_dimension_numbers<[1], [0], [0], [1], [0, 0, 1, 1], [], []>} : vector<16x16xf32>, vector<16x64xf32>, vector<16x64xf32> -> vector<16x64xf32>
    %c1_14 = arith.constant 1 : index
    %c0_15 = arith.constant 0 : index
    %c0_16 = arith.constant 0 : index
    %13 = vector.load %arg5[%c1_14, %c0_15, %c0_16] : memref<6x16x64xf32, #tpu.memory_space<vmem>>, vector<1x16x64xf32>
    %14 = vector.shape_cast %13 : vector<1x16x64xf32> to vector<16x64xf32>
    %15 = vector.shape_cast %12 : vector<16x64xf32> to vector<1x16x64xf32>
    tpu.vector_store %arg5[%c1_14, %c0_15, %c0_16], %15 {strides = array<i32>} : memref<6x16x64xf32, #tpu.memory_space<vmem>>, vector<1x16x64xf32>,
    %c2 = arith.constant 2 : index
    %c0_17 = arith.constant 0 : index
    %c0_18 = arith.constant 0 : index
    %16 = vector.load %arg2[%c2, %c0_17, %c0_18] : memref<6x16x16xf32, #tpu.memory_space<vmem>>, vector<1x16x16xf32>
    %17 = vector.shape_cast %16 : vector<1x16x16xf32> to vector<16x16xf32>
    %cst_19 = arith.constant dense<0.000000e+00> : vector<16x16xf32>
    %18 = tpu.matmul %0, %17, %cst_19 {dimension_numbers = #tpu.dot_dimension_numbers<[1], [0], [0], [1], [0, 0, 1, 1], [], []>} : vector<16x16xf32>, vector<16x16xf32>, vector<16x16xf32> -> vector<16x16xf32>
    %cst_20 = arith.constant dense<0.000000e+00> : vector<16x64xf32>
    %19 = tpu.matmul %18, %1, %cst_20 {dimension_numbers = #tpu.dot_dimension_numbers<[1], [0], [0], [1], [0, 0, 1, 1], [], []>} : vector<16x16xf32>, vector<16x64xf32>, vector<16x64xf32> -> vector<16x64xf32>
    %c2_21 = arith.constant 2 : index
    %c0_22 = arith.constant 0 : index
    %c0_23 = arith.constant 0 : index
    %20 = vector.load %arg5[%c2_21, %c0_22, %c0_23] : memref<6x16x64xf32, #tpu.memory_space<vmem>>, vector<1x16x64xf32>
    %21 = vector.shape_cast %20 : vector<1x16x64xf32> to vector<16x64xf32>
    %22 = vector.shape_cast %19 : vector<16x64xf32> to vector<1x16x64xf32>
    tpu.vector_store %arg5[%c2_21, %c0_22, %c0_23], %22 {strides = array<i32>} : memref<6x16x64xf32, #tpu.memory_space<vmem>>, vector<1x16x64xf32>,
    %c3 = arith.constant 3 : index
    %c0_24 = arith.constant 0 : index
    %c0_25 = arith.constant 0 : index
    %23 = vector.load %arg2[%c3, %c0_24, %c0_25] : memref<6x16x16xf32, #tpu.memory_space<vmem>>, vector<1x16x16xf32>
    %24 = vector.shape_cast %23 : vector<1x16x16xf32> to vector<16x16xf32>
    %cst_26 = arith.constant dense<0.000000e+00> : vector<16x16xf32>
    %25 = tpu.matmul %0, %24, %cst_26 {dimension_numbers = #tpu.dot_dimension_numbers<[1], [0], [0], [1], [0, 0, 1, 1], [], []>} : vector<16x16xf32>, vector<16x16xf32>, vector<16x16xf32> -> vector<16x16xf32>
    %cst_27 = arith.constant dense<0.000000e+00> : vector<16x64xf32>
    %26 = tpu.matmul %25, %1, %cst_27 {dimension_numbers = #tpu.dot_dimension_numbers<[1], [0], [0], [1], [0, 0, 1, 1], [], []>} : vector<16x16xf32>, vector<16x64xf32>, vector<16x64xf32> -> vector<16x64xf32>
    %c3_28 = arith.constant 3 : index
    %c0_29 = arith.constant 0 : index
    %c0_30 = arith.constant 0 : index
    %27 = vector.load %arg5[%c3_28, %c0_29, %c0_30] : memref<6x16x64xf32, #tpu.memory_space<vmem>>, vector<1x16x64xf32>
    %28 = vector.shape_cast %27 : vector<1x16x64xf32> to vector<16x64xf32>
    %29 = vector.shape_cast %26 : vector<16x64xf32> to vector<1x16x64xf32>
    tpu.vector_store %arg5[%c3_28, %c0_29, %c0_30], %29 {strides = array<i32>} : memref<6x16x64xf32, #tpu.memory_space<vmem>>, vector<1x16x64xf32>,
    %c4 = arith.constant 4 : index
    %c0_31 = arith.constant 0 : index
    %c0_32 = arith.constant 0 : index
    %30 = vector.load %arg2[%c4, %c0_31, %c0_32] : memref<6x16x16xf32, #tpu.memory_space<vmem>>, vector<1x16x16xf32>
    %31 = vector.shape_cast %30 : vector<1x16x16xf32> to vector<16x16xf32>
    %cst_33 = arith.constant dense<0.000000e+00> : vector<16x16xf32>
    %32 = tpu.matmul %0, %31, %cst_33 {dimension_numbers = #tpu.dot_dimension_numbers<[1], [0], [0], [1], [0, 0, 1, 1], [], []>} : vector<16x16xf32>, vector<16x16xf32>, vector<16x16xf32> -> vector<16x16xf32>
    %cst_34 = arith.constant dense<0.000000e+00> : vector<16x64xf32>
    %33 = tpu.matmul %32, %1, %cst_34 {dimension_numbers = #tpu.dot_dimension_numbers<[1], [0], [0], [1], [0, 0, 1, 1], [], []>} : vector<16x16xf32>, vector<16x64xf32>, vector<16x64xf32> -> vector<16x64xf32>
    %c4_35 = arith.constant 4 : index
    %c0_36 = arith.constant 0 : index
    %c0_37 = arith.constant 0 : index
    %34 = vector.load %arg5[%c4_35, %c0_36, %c0_37] : memref<6x16x64xf32, #tpu.memory_space<vmem>>, vector<1x16x64xf32>
    %35 = vector.shape_cast %34 : vector<1x16x64xf32> to vector<16x64xf32>
    %36 = vector.shape_cast %33 : vector<16x64xf32> to vector<1x16x64xf32>
    tpu.vector_store %arg5[%c4_35, %c0_36, %c0_37], %36 {strides = array<i32>} : memref<6x16x64xf32, #tpu.memory_space<vmem>>, vector<1x16x64xf32>,
    %c5 = arith.constant 5 : index
    %c0_38 = arith.constant 0 : index
    %c0_39 = arith.constant 0 : index
    %37 = vector.load %arg2[%c5, %c0_38, %c0_39] : memref<6x16x16xf32, #tpu.memory_space<vmem>>, vector<1x16x16xf32>
    %38 = vector.shape_cast %37 : vector<1x16x16xf32> to vector<16x16xf32>
    %cst_40 = arith.constant dense<0.000000e+00> : vector<16x16xf32>
    %39 = tpu.matmul %0, %38, %cst_40 {dimension_numbers = #tpu.dot_dimension_numbers<[1], [0], [0], [1], [0, 0, 1, 1], [], []>} : vector<16x16xf32>, vector<16x16xf32>, vector<16x16xf32> -> vector<16x16xf32>
    %cst_41 = arith.constant dense<0.000000e+00> : vector<16x64xf32>
    %40 = tpu.matmul %39, %1, %cst_41 {dimension_numbers = #tpu.dot_dimension_numbers<[1], [0], [0], [1], [0, 0, 1, 1], [], []>} : vector<16x16xf32>, vector<16x64xf32>, vector<16x64xf32> -> vector<16x64xf32>
    %c5_42 = arith.constant 5 : index
    %c0_43 = arith.constant 0 : index
    %c0_44 = arith.constant 0 : index
    %41 = vector.load %arg5[%c5_42, %c0_43, %c0_44] : memref<6x16x64xf32, #tpu.memory_space<vmem>>, vector<1x16x64xf32>
    %42 = vector.shape_cast %41 : vector<1x16x64xf32> to vector<16x64xf32>
    %43 = vector.shape_cast %40 : vector<16x64xf32> to vector<1x16x64xf32>
    tpu.vector_store %arg5[%c5_42, %c0_43, %c0_44], %43 {strides = array<i32>} : memref<6x16x64xf32, #tpu.memory_space<vmem>>, vector<1x16x64xf32>,
    return
  }
  func.func @transform_0(%arg0: i32, %arg1: i32) -> (i32, i32, i32) {
    %c0_i32 = arith.constant 0 : i32
    %c0_i32_0 = arith.constant 0 : i32
    %c0_i32_1 = arith.constant 0 : i32
    return %arg0, %c0_i32, %c0_i32_0 : i32, i32, i32
  }
  func.func @transform_1(%arg0: i32, %arg1: i32) -> (i32, i32) {
    %c0_i32 = arith.constant 0 : i32
    %c0_i32_0 = arith.constant 0 : i32
    return %arg1, %c0_i32 : i32, i32
  }
  func.func @transform_2(%arg0: i32, %arg1: i32) -> (i32, i32) {
    %c0_i32 = arith.constant 0 : i32
    %c0_i32_0 = arith.constant 0 : i32
    %c0_i32_1 = arith.constant 0 : i32
    return %c0_i32, %c0_i32_0 : i32, i32
  }
  func.func @transform_3(%arg0: i32, %arg1: i32) -> (i32, i32, i32) {
    %c0_i32 = arith.constant 0 : i32
    %c0_i32_0 = arith.constant 0 : i32
    return %arg0, %arg1, %c0_i32 : i32, i32, i32
  }
}

</mosaic_0001>

<llo_original>
// kernel: tpu_custom_call.1
$region0: #{tpu_custom_call.1}
  #allocation0 [shape = 'u32[]', space=smem, size = 0x4, offset = 0x4, fixed_abs, tag = 'smem constant byte address 0x4 - core index']
  #allocation1 [shape = 'u32[144,128]{1,0:T(1,128)}', space=vmem, size = 0x12000, scoped, tag = 'internal scratch']
  #allocation6 [shape = 's32[]', space=sflag, size = 0x4, offset = 0, fixed_abs, tag = 'sflag constant byte address 0x0 - dummy sync flag']
  %s0 = inlined_call_operand.hbm [shape: f32[6,16,16], index: 0, kind: input, shape index: {}]
  %s1 = inlined_call_operand.vmem [shape: f32[64,16], index: 1, kind: input, shape index: {}]
  %s2 = inlined_call_operand.vmem [shape: f32[16,64], index: 2, kind: input, shape index: {}]
  %s3 = inlined_call_operand.hbm [shape: f32[6,64,64], index: 3, kind: output, shape index: {}]
  %s4 = sld [smem:[#allocation0]]
  $region49: #{tpu_custom_call.1} parent=0
    _
  %s6 = ssub.s32 1, %s4
  %s7 = scalar_select 0, %s6, %s4
  $region1: #{tpu_custom_call.1} parent=0
    #allocation2 [shape = 'u8[49152]{0}', space=vmem, size = 0xc000, scoped, tag = 'input window, operand 0, single buffered']
    #allocation3 [shape = 's32[2]{0}', space=sflag, size = 0x8, scoped, tag = 'scoped memory for tpu_custom_call.1']
    #allocation4 [shape = 's32[2]{0}', space=sflag, size = 0x8, scoped, tag = 'scoped memory for tpu_custom_call.1']
    #allocation5 [shape = 'u8[98304]{0}', space=vmem, size = 0x18000, scoped, tag = 'output window, operand 0']
    %8 = vsyncpa [#allocation3], 0
    %9 = vsyncpa [#allocation4], 0
    %s10 = scalar_lea.sflag [#allocation4], 1
    %11 = vsyncpa %s10, 0
    loop: start=0, step=1, limit=6
    $region2: #{tpu_custom_call.1} parent=1 // loop_pre_header
      _
    $region3: #{tpu_custom_call.1} parent=1 // loop_header
      %s13 = sphi 0, %s17
      %p14 = scmp.ge.s32.totalorder %s13, 6
      %s20 = sphi 0, %s32
      %s21 = sphi 0, %s28
      %s22 = sphi 0, %s20
      %s23 = sphi 0, %s21
      %s24 = sphi 0, %s22
      %s25 = sphi 0, %s23
      %s35 = sphi 0, %s37
      %s38 = sphi 0, %s35
      %s39 = sphi 0, %s38
      %s55 = sphi 0, %s39
      %s61 = sphi 0, %s63
      %s64 = sphi 0, %s61
      %s65 = sphi 0, %s64
      %s81 = sphi 0, %s65
      %s85 = sphi 0, %s85
      %s87 = sphi 0, %s85
      %s88 = sphi 0, %s87
      %s102 = sphi 0, %s88
      %s110 = sphi 0, %s112
      %s113 = sphi 0, %s110
      %s114 = sphi 0, %s113
      %s130 = sphi 0, %s114
    $region4: #{tpu_custom_call.1} parent=1 // loop_header_branch
      %16 = sbr.rel (%p14) target = $region8
    $region5: #{tpu_custom_call.1} parent=1 // loop_body
      %s18 = ssub.s32 %s13, 1
      %s19 = ssub.s32 %s13, 2
      %s26 = sadd.s32 1, %s21
      %p27 = scmp.ge.s32.totalorder %s26, 4
      %s28 = scalar_select %p27, 0, %s26
      %s29 = sadd.s32 1, %s20
      %s30 = scalar_select %p27, %s29, %s20
      %p31 = scmp.ge.s32.totalorder %s30, 1
      %s32 = scalar_select %p31, 0, %s30
      %s33 = ssub.s32 %s20, %s32
      %p34 = scmp.eq.s32.totalorder %s33, 0
      %s36 = sadd.s32 %s35, 1
      %s37 = scalar_select %p34, %s35, %s36
      %p40 = pneg %p34
      %p41 = scmp.eq.s32.totalorder %s13, 3
      %p42 = por %p40, %p41
      %p43 = scmp.ne.s32.totalorder %s35, %s38
      %p44 = scmp.eq.s32.totalorder %s13, 0
      %p45 = por %p43, %p44
      %p46 = scmp.ne.s32.totalorder %s35, %s38
      %p47 = scmp.eq.s32.totalorder %s18, 3
      %p48 = por %p46, %p47
      %p49 = scmp.ne.s32.totalorder %s38, %s39
      %p50 = scmp.eq.s32.totalorder %s18, 0
      %p51 = por %p49, %p50
      %p52 = scmp.ne.s32.totalorder %s38, %s39
      %p53 = scmp.eq.s32.totalorder %s19, 3
      %p54 = por %p52, %p53
      %p56 = scmp.ne.s32.totalorder %s39, %s55
      %p57 = scmp.eq.s32.totalorder %s19, 0
      %p58 = por %p56, %p57
      %s59 = ssub.s32 %s21, %s28
      %p60 = scmp.eq.s32.totalorder %s59, 0
      %s62 = sadd.s32 %s61, 1
      %s63 = scalar_select %p60, %s61, %s62
      %p66 = pneg %p60
      %p67 = scmp.eq.s32.totalorder %s13, 3
      %p68 = por %p66, %p67
      %p69 = scmp.ne.s32.totalorder %s61, %s64
      %p70 = scmp.eq.s32.totalorder %s13, 0
      %p71 = por %p69, %p70
      %p72 = scmp.ne.s32.totalorder %s61, %s64
      %p73 = scmp.eq.s32.totalorder %s18, 3
      %p74 = por %p72, %p73
      %p75 = scmp.ne.s32.totalorder %s64, %s65
      %p76 = scmp.eq.s32.totalorder %s18, 0
      %p77 = por %p75, %p76
      %p78 = scmp.ne.s32.totalorder %s64, %s65
      %p79 = scmp.eq.s32.totalorder %s19, 3
      %p80 = por %p78, %p79
      %p82 = scmp.ne.s32.totalorder %s65, %s81
      %p83 = scmp.eq.s32.totalorder %s19, 0
      %p84 = por %p82, %p83
      %s86 = sadd.s32 %s85, 1
      %p89 = scmp.eq.s32.totalorder %s13, 3
      %p90 = scmp.ne.s32.totalorder %s85, %s87
      %p91 = scmp.eq.s32.totalorder %s13, 0
      %p92 = por %p90, %p91
      %p93 = scmp.ne.s32.totalorder %s85, %s87
      %p94 = scmp.eq.s32.totalorder %s18, 3
      %p95 = por %p93, %p94
      %p96 = scmp.ne.s32.totalorder %s87, %s88
      %p97 = scmp.eq.s32.totalorder %s18, 0
      %p98 = por %p96, %p97
      %p99 = scmp.ne.s32.totalorder %s87, %s88
      %p100 = scmp.eq.s32.totalorder %s19, 3
      %p101 = por %p99, %p100
      %p103 = scmp.ne.s32.totalorder %s88, %s102
      %p104 = scmp.eq.s32.totalorder %s19, 0
      %p105 = por %p103, %p104
      %s106 = ssub.s32 %s20, %s32
      %s107 = ssub.s32 %s21, %s28
      %s108 = sor.u32 %s106, %s107
      %p109 = scmp.eq.s32.totalorder %s108, 0
      %s111 = sadd.s32 %s110, 1
      %s112 = scalar_select %p109, %s110, %s111
      %p115 = pneg %p109
      %p116 = scmp.eq.s32.totalorder %s13, 3
      %p117 = por %p115, %p116
      %p118 = scmp.ne.s32.totalorder %s110, %s113
      %p119 = scmp.eq.s32.totalorder %s13, 0
      %p120 = por %p118, %p119
      %p121 = scmp.ne.s32.totalorder %s110, %s113
      %p122 = scmp.eq.s32.totalorder %s18, 3
      %p123 = por %p121, %p122
      %p124 = scmp.ne.s32.totalorder %s113, %s114
      %p125 = scmp.eq.s32.totalorder %s18, 0
      %p126 = por %p124, %p125
      %p127 = scmp.ne.s32.totalorder %s113, %s114
      %p128 = scmp.eq.s32.totalorder %s19, 3
      %p129 = por %p127, %p128
      %p131 = scmp.ne.s32.totalorder %s114, %s130
      %p132 = scmp.eq.s32.totalorder %s19, 0
      %p133 = por %p131, %p132
      %p134 = scmp.le.s32.totalorder 1, %s13
      %p135 = scmp.lt.s32.totalorder %s13, 5
      %p136 = pnand %p134, %p135
      %p137 = pneg %p136
      // Predicated region
      $region9: #{tpu_custom_call.1} parent=5 // pred_check
        _
      $region10: #{tpu_custom_call.1} parent=5 // pred_check_branch
        %139 = sbr.rel (%p136) target = $region12
      $region11: #{tpu_custom_call.1} parent=5 // pred_region
        %s140 = ssub.s32 %s13, 1
        // Predicated region
        $region13: #{tpu_custom_call.1} parent=11 // pred_check
          %p141 = pneg %p51
        $region14: #{tpu_custom_call.1} parent=11 // pred_check_branch
          %143 = sbr.rel (%p141) target = $region16
        $region15: #{tpu_custom_call.1} parent=11 // pred_region
          %s144 = smul.u32 6, %s22
          %s146 = ssub.s32 1536, 1536
          %147 = vsyncadd [#allocation3], %s146
          %s148 = smul.addr %s144, 2
          %s149 = smul.addr %s148, 128
          %s150 = scalar_lea.hbm %s0, %s149
          %s151 = sshll.u32 [#allocation2], 4
          %s152 = int_to_ptr.vmem [resolvable:$true] %s151
          %157 = dma.hbm_to_vmem [thread:$0]  %s150, 1536, %s152, [#allocation3], 128, 128, 8
        $region16: #{tpu_custom_call.1} parent=11 // pred_fallthru
          _
        // Predicated region
        $region17: #{tpu_custom_call.1} parent=11 // pred_check
          %p158 = pneg %p98
        $region18: #{tpu_custom_call.1} parent=11 // pred_check_branch
          %160 = sbr.rel (%p158) target = $region20
        $region19: #{tpu_custom_call.1} parent=11 // pred_region
          _
        $region20: #{tpu_custom_call.1} parent=11 // pred_fallthru
          _
      $region12: #{tpu_custom_call.1} parent=5 // pred_fallthru
        _
      %p161 = scmp.lt.s32.totalorder %s13, 4
      // Predicated region
      $region21: #{tpu_custom_call.1} parent=5 // pred_check
        %p162 = pneg %p161
      $region22: #{tpu_custom_call.1} parent=5 // pred_check_branch
        %164 = sbr.rel (%p162) target = $region24
      $region23: #{tpu_custom_call.1} parent=5 // pred_region
        // Predicated region
        $region25: #{tpu_custom_call.1} parent=23 // pred_check
          %p165 = pneg %p71
        $region26: #{tpu_custom_call.1} parent=23 // pred_check_branch
          %167 = sbr.rel (%p165) target = $region28
        $region27: #{tpu_custom_call.1} parent=23 // pred_region
          %s168 = smul.u32 2, %s21
          %p169 = scmp.lt.s32.totalorder %s168, 7
          %s170 = scalar_select %p169, %s168, 7
          %s171 = smul.addr %s170, 8
          %s172 = scalar_lea.vmem %s1, %s171
          %s173 = smul.u32 2, %s21
        $region28: #{tpu_custom_call.1} parent=23 // pred_fallthru
          _
      $region24: #{tpu_custom_call.1} parent=5 // pred_fallthru
        _
      %p174 = scmp.le.s32.totalorder 1, %s13
      %p175 = scmp.lt.s32.totalorder %s13, 5
      %p176 = pnand %p174, %p175
      %p177 = pneg %p176
      // Predicated region
      $region29: #{tpu_custom_call.1} parent=5 // pred_check
        _
      $region30: #{tpu_custom_call.1} parent=5 // pred_check_branch
        %179 = sbr.rel (%p176) target = $region32
      $region31: #{tpu_custom_call.1} parent=5 // pred_region
        %s180 = ssub.s32 %s13, 1
        // Predicated region
        $region33: #{tpu_custom_call.1} parent=31 // pred_check
          %p181 = pneg %p51
        $region34: #{tpu_custom_call.1} parent=31 // pred_check_branch
          %183 = sbr.rel (%p181) target = $region36
        $region35: #{tpu_custom_call.1} parent=31 // pred_region
          %184 = dma.done [#allocation3], 1536
        $region36: #{tpu_custom_call.1} parent=31 // pred_fallthru
          _
        %p185 = pneg %p51
        %p186 = pneg %p48
        %s187 = smul.u32 2, %s23
        %p188 = scmp.lt.s32.totalorder %s187, 7
        %s189 = scalar_select %p188, %s187, 7
        %s190 = smul.addr %s189, 8
        %s191 = scalar_lea.vmem %s1, %s190
        %p192 = pneg %p77
        %p193 = pneg %p74
        %p194 = pneg %p98
        %p195 = pneg %p95
        %p196 = pneg %p126
        %p197 = pneg %p123
        %s198 = sand.u32 %s113, 1
        %s199 = scalar_lea.sflag [#allocation4], %s198
        %s200 = sand.u32 %s113, 1
        %s201 = smul.addr %s200, 96
        %s202 = scalar_lea.vmem [#allocation5], %s201
        %s203 = smul.u32 6, %s22
        %s204 = smul.u32 2, %s23
        %p205 = scmp.lt.s32.totalorder %s204, 7
        %s206 = scalar_select %p205, %s204, 7
        %s207 = smul.addr %s206, 8
        %s208 = scalar_lea.vmem %s1, %s207
        %s209 = smul.u32 2, %s23
        %s210 = smul.u32 6, %s22
        %s211 = smul.u32 2, %s23
        %v212 = vld [vmem:[%s208] sm:$0xff]
        %v213 = vld [vmem:[%s208 + $0x8] sm:$0xff]
        %v214 = vld [vmem:[%s2] sm:$0xff]
        %v215 = vld [vmem:[%s2 + $0x8] sm:$0xff]
        %v216 = vld [vmem:[#allocation2] sm:$0xff]
        %v217 = vld [vmem:[#allocation2 + $0x8] sm:$0xff]
        %vm218 = vcmask 130048
        %v220 = vsel %vm218, %v212, 0
        %v223 = vsel %vm218, %v213, 0
        %225 = vmatprep.subr.mxu0 0.0
        %226 = vmatpush1.msra.mxu0 0.0
        %227 = vmatprep.subr.mxu0 0.0
        %228 = vmatpush1.msra.mxu0 0.0
        %229 = vmatprep.subr.mxu0 0.0
        %230 = vmatpush1.msra.mxu0 0.0
        %231 = vmatprep.subr.mxu0 0.0
        %232 = vmatpush1.msra.mxu0 0.0
        %233 = vmatprep.subr.mxu0 0.0
        %234 = vmatpush1.msra.mxu0 0.0
        %235 = vmatprep.subr.mxu0 0.0
        %236 = vmatpush1.msra.mxu0 0.0
        %237 = vmatprep.subr.mxu0 0.0
        %238 = vmatpush1.msra.mxu0 0.0
        %239 = vmatprep.subr.mxu0 0.0
        %240 = vmatpush1.msra.mxu0 0.0
        %241 = vmatprep.subr.mxu0 0.0
        %242 = vmatpush1.msra.mxu0 0.0
        %243 = vmatprep.subr.mxu0 0.0
        %244 = vmatpush1.msra.mxu0 0.0
        %245 = vmatprep.subr.mxu0 0.0
        %246 = vmatpush1.msra.mxu0 0.0
        %247 = vmatprep.subr.mxu0 0.0
        %248 = vmatpush1.msra.mxu0 0.0
        %249 = vmatprep.subr.mxu0 0.0
        %250 = vmatpush1.msra.mxu0 0.0
        %251 = vmatprep.subr.mxu0 0.0
        %252 = vmatpush1.msra.mxu0 0.0
        %253 = vmatprep.subr.mxu0 0.0
        %254 = vmatpush1.msra.mxu0 %v217
        %255 = vmatprep.subr.mxu0 0.0
        %256 = vmatpush1.msra.mxu0 %v216
        %257 = vmatprep.subr.mxu0 0.0
        %258 = vmatpush2.msra.mxu0 0.0
        %259 = vmatprep.subr.mxu0 0.0
        %260 = vmatpush2.msra.mxu0 0.0
        %261 = vmatprep.subr.mxu0 0.0
        %262 = vmatpush2.msra.mxu0 0.0
        %263 = vmatprep.subr.mxu0 0.0
        %264 = vmatpush2.msra.mxu0 0.0
        %265 = vmatprep.subr.mxu0 0.0
        %266 = vmatpush2.msra.mxu0 0.0
        %267 = vmatprep.subr.mxu0 0.0
        %268 = vmatpush2.msra.mxu0 0.0
        %269 = vmatprep.subr.mxu0 0.0
        %270 = vmatpush2.msra.mxu0 0.0
        %271 = vmatprep.subr.mxu0 0.0
        %272 = vmatpush2.msra.mxu0 0.0
        %273 = vmatprep.subr.mxu0 0.0
        %274 = vmatpush2.msra.mxu0 0.0
        %275 = vmatprep.subr.mxu0 0.0
        %276 = vmatpush2.msra.mxu0 0.0
        %277 = vmatprep.subr.mxu0 0.0
        %278 = vmatpush2.msra.mxu0 0.0
        %279 = vmatprep.subr.mxu0 0.0
        %280 = vmatpush2.msra.mxu0 0.0
        %281 = vmatprep.subr.mxu0 0.0
        %282 = vmatpush2.msra.mxu0 0.0
        %283 = vmatprep.subr.mxu0 0.0
        %284 = vmatpush2.msra.mxu0 0.0
        %285 = vmatprep.subr.mxu0 0.0
        %286 = vmatpush2.msra.mxu0 0.0
        %287 = vmatprep.subr.mxu0 0.0
        %288 = vmatpush2.msra.mxu0 0.0
        %289 = vmatprep.mubr.f32.mxu0 0.0
        %290 = vmatmul.mubr.f32.gmra.mxu0 %v220
        %v291 = vpop.f32.mrf.mxu0
        %v292 = vadd.f32 0.0, %v291
        %v293 = vpop.f32.mrf.mxu0
        %294 = vmatprep.mubr.f32.mxu0 0.0
        %295 = vmatmul.mubr.f32.gmra.mxu0 %v223
        %v296 = vpop.f32.mrf.mxu0
        %v297 = vadd.f32 0.0, %v296
        %v298 = vpop.f32.mrf.mxu0
        %299 = vdwg.mxu0
        %v301 = vsel %vm218, %v292, 0
        %v304 = vsel %vm218, %v297, 0
        %306 = vmatprep.subr.mxu0 0.0
        %307 = vmatpush1.msra.mxu0 0.0
        %308 = vmatprep.subr.mxu0 0.0
        %309 = vmatpush1.msra.mxu0 0.0
        %310 = vmatprep.subr.mxu0 0.0
        %311 = vmatpush1.msra.mxu0 0.0
        %312 = vmatprep.subr.mxu0 0.0
        %313 = vmatpush1.msra.mxu0 0.0
        %314 = vmatprep.subr.mxu0 0.0
        %315 = vmatpush1.msra.mxu0 0.0
        %316 = vmatprep.subr.mxu0 0.0
        %317 = vmatpush1.msra.mxu0 0.0
        %318 = vmatprep.subr.mxu0 0.0
        %319 = vmatpush1.msra.mxu0 0.0
        %320 = vmatprep.subr.mxu0 0.0
        %321 = vmatpush1.msra.mxu0 0.0
        %322 = vmatprep.subr.mxu0 0.0
        %323 = vmatpush1.msra.mxu0 0.0
        %324 = vmatprep.subr.mxu0 0.0
        %325 = vmatpush1.msra.mxu0 0.0
        %326 = vmatprep.subr.mxu0 0.0
        %327 = vmatpush1.msra.mxu0 0.0
        %328 = vmatprep.subr.mxu0 0.0
        %329 = vmatpush1.msra.mxu0 0.0
        %330 = vmatprep.subr.mxu0 0.0
        %331 = vmatpush1.msra.mxu0 0.0
        %332 = vmatprep.subr.mxu0 0.0
        %333 = vmatpush1.msra.mxu0 0.0
        %334 = vmatprep.subr.mxu0 0.0
        %335 = vmatpush1.msra.mxu0 %v215
        %336 = vmatprep.subr.mxu0 0.0
        %337 = vmatpush1.msra.mxu0 %v214
        %338 = vmatprep.subr.mxu0 0.0
        %339 = vmatpush2.msra.mxu0 0.0
        %340 = vmatprep.subr.mxu0 0.0
        %341 = vmatpush2.msra.mxu0 0.0
        %342 = vmatprep.subr.mxu0 0.0
        %343 = vmatpush2.msra.mxu0 0.0
        %344 = vmatprep.subr.mxu0 0.0
        %345 = vmatpush2.msra.mxu0 0.0
        %346 = vmatprep.subr.mxu0 0.0
        %347 = vmatpush2.msra.mxu0 0.0
        %348 = vmatprep.subr.mxu0 0.0
        %349 = vmatpush2.msra.mxu0 0.0
        %350 = vmatprep.subr.mxu0 0.0
        %351 = vmatpush2.msra.mxu0 0.0
        %352 = vmatprep.subr.mxu0 0.0
        %353 = vmatpush2.msra.mxu0 0.0
        %354 = vmatprep.subr.mxu0 0.0
        %355 = vmatpush2.msra.mxu0 0.0
        %356 = vmatprep.subr.mxu0 0.0
        %357 = vmatpush2.msra.mxu0 0.0
        %358 = vmatprep.subr.mxu0 0.0
        %359 = vmatpush2.msra.mxu0 0.0
        %360 = vmatprep.subr.mxu0 0.0
        %361 = vmatpush2.msra.mxu0 0.0
        %362 = vmatprep.subr.mxu0 0.0
        %363 = vmatpush2.msra.mxu0 0.0
        %364 = vmatprep.subr.mxu0 0.0
        %365 = vmatpush2.msra.mxu0 0.0
        %366 = vmatprep.subr.mxu0 0.0
        %367 = vmatpush2.msra.mxu0 0.0
        %368 = vmatprep.subr.mxu0 0.0
        %369 = vmatpush2.msra.mxu0 0.0
        %370 = vmatprep.mubr.f32.mxu0 0.0
        %371 = vmatmul.mubr.f32.gmra.mxu0 %v301
        %v372 = vpop.f32.mrf.mxu0
        %v373 = vadd.f32 0.0, %v372
        %v374 = vpop.f32.mrf.mxu0
        %375 = vmatprep.mubr.f32.mxu0 0.0
        %376 = vmatmul.mubr.f32.gmra.mxu0 %v304
        %v377 = vpop.f32.mrf.mxu0
        %v378 = vadd.f32 0.0, %v377
        %v379 = vpop.f32.mrf.mxu0
        %380 = vdwg.mxu0
        %vm381 = vcmask 523264
        %382 = vst.msk [vmem:[%s202] sm:$0xff] %vm381, %v373
        %383 = vst.msk [vmem:[%s202 + $0x8] sm:$0xff] %vm381, %v378
        %s384 = scalar_lea.vmem [#allocation2], 16
        %v385 = vld [vmem:[%s384] sm:$0xff]
        %v386 = vld [vmem:[%s384 + $0x8] sm:$0xff]
        %387 = vmatprep.subr.mxu0 0.0
        %388 = vmatpush1.msra.mxu0 0.0
        %389 = vmatprep.subr.mxu0 0.0
        %390 = vmatpush1.msra.mxu0 0.0
        %391 = vmatprep.subr.mxu0 0.0
        %392 = vmatpush1.msra.mxu0 0.0
        %393 = vmatprep.subr.mxu0 0.0
        %394 = vmatpush1.msra.mxu0 0.0
        %395 = vmatprep.subr.mxu0 0.0
        %396 = vmatpush1.msra.mxu0 0.0
        %397 = vmatprep.subr.mxu0 0.0
        %398 = vmatpush1.msra.mxu0 0.0
        %399 = vmatprep.subr.mxu0 0.0
        %400 = vmatpush1.msra.mxu0 0.0
        %401 = vmatprep.subr.mxu0 0.0
        %402 = vmatpush1.msra.mxu0 0.0
        %403 = vmatprep.subr.mxu0 0.0
        %404 = vmatpush1.msra.mxu0 0.0
        %405 = vmatprep.subr.mxu0 0.0
        %406 = vmatpush1.msra.mxu0 0.0
        %407 = vmatprep.subr.mxu0 0.0
        %408 = vmatpush1.msra.mxu0 0.0
        %409 = vmatprep.subr.mxu0 0.0
        %410 = vmatpush1.msra.mxu0 0.0
        %411 = vmatprep.subr.mxu0 0.0
        %412 = vmatpush1.msra.mxu0 0.0
        %413 = vmatprep.subr.mxu0 0.0
        %414 = vmatpush1.msra.mxu0 0.0
        %415 = vmatprep.subr.mxu0 0.0
        %416 = vmatpush1.msra.mxu0 %v386
        %417 = vmatprep.subr.mxu0 0.0
        %418 = vmatpush1.msra.mxu0 %v385
        %419 = vmatprep.subr.mxu0 0.0
        %420 = vmatpush2.msra.mxu0 0.0
        %421 = vmatprep.subr.mxu0 0.0
        %422 = vmatpush2.msra.mxu0 0.0
        %423 = vmatprep.subr.mxu0 0.0
        %424 = vmatpush2.msra.mxu0 0.0
        %425 = vmatprep.subr.mxu0 0.0
        %426 = vmatpush2.msra.mxu0 0.0
        %427 = vmatprep.subr.mxu0 0.0
        %428 = vmatpush2.msra.mxu0 0.0
        %429 = vmatprep.subr.mxu0 0.0
        %430 = vmatpush2.msra.mxu0 0.0
        %431 = vmatprep.subr.mxu0 0.0
        %432 = vmatpush2.msra.mxu0 0.0
        %433 = vmatprep.subr.mxu0 0.0
        %434 = vmatpush2.msra.mxu0 0.0
        %435 = vmatprep.subr.mxu0 0.0
        %436 = vmatpush2.msra.mxu0 0.0
        %437 = vmatprep.subr.mxu0 0.0
        %438 = vmatpush2.msra.mxu0 0.0
        %439 = vmatprep.subr.mxu0 0.0
        %440 = vmatpush2.msra.mxu0 0.0
        %441 = vmatprep.subr.mxu0 0.0
        %442 = vmatpush2.msra.mxu0 0.0
        %443 = vmatprep.subr.mxu0 0.0
        %444 = vmatpush2.msra.mxu0 0.0
        %445 = vmatprep.subr.mxu0 0.0
        %446 = vmatpush2.msra.mxu0 0.0
        %447 = vmatprep.subr.mxu0 0.0
        %448 = vmatpush2.msra.mxu0 0.0
        %449 = vmatprep.subr.mxu0 0.0
        %450 = vmatpush2.msra.mxu0 0.0
        %451 = vmatprep.mubr.f32.mxu0 0.0
        %452 = vmatmul.mubr.f32.gmra.mxu0 %v220
        %v453 = vpop.f32.mrf.mxu0
        %v454 = vadd.f32 0.0, %v453
        %v455 = vpop.f32.mrf.mxu0
        %456 = vmatprep.mubr.f32.mxu0 0.0
        %457 = vmatmul.mubr.f32.gmra.mxu0 %v223
        %v458 = vpop.f32.mrf.mxu0
        %v459 = vadd.f32 0.0, %v458
        %v460 = vpop.f32.mrf.mxu0
        %461 = vdwg.mxu0
        %v463 = vsel %vm218, %v454, 0
        %v466 = vsel %vm218, %v459, 0
        %468 = vmatprep.subr.mxu0 0.0
        %469 = vmatpush1.msra.mxu0 0.0
        %470 = vmatprep.subr.mxu0 0.0
        %471 = vmatpush1.msra.mxu0 0.0
        %472 = vmatprep.subr.mxu0 0.0
        %473 = vmatpush1.msra.mxu0 0.0
        %474 = vmatprep.subr.mxu0 0.0
        %475 = vmatpush1.msra.mxu0 0.0
        %476 = vmatprep.subr.mxu0 0.0
        %477 = vmatpush1.msra.mxu0 0.0
        %478 = vmatprep.subr.mxu0 0.0
        %479 = vmatpush1.msra.mxu0 0.0
        %480 = vmatprep.subr.mxu0 0.0
        %481 = vmatpush1.msra.mxu0 0.0
        %482 = vmatprep.subr.mxu0 0.0
        %483 = vmatpush1.msra.mxu0 0.0
        %484 = vmatprep.subr.mxu0 0.0
        %485 = vmatpush1.msra.mxu0 0.0
        %486 = vmatprep.subr.mxu0 0.0
        %487 = vmatpush1.msra.mxu0 0.0
        %488 = vmatprep.subr.mxu0 0.0
        %489 = vmatpush1.msra.mxu0 0.0
        %490 = vmatprep.subr.mxu0 0.0
        %491 = vmatpush1.msra.mxu0 0.0
        %492 = vmatprep.subr.mxu0 0.0
        %493 = vmatpush1.msra.mxu0 0.0
        %494 = vmatprep.subr.mxu0 0.0
        %495 = vmatpush1.msra.mxu0 0.0
        %496 = vmatprep.subr.mxu0 0.0
        %497 = vmatpush1.msra.mxu0 %v215
        %498 = vmatprep.subr.mxu0 0.0
        %499 = vmatpush1.msra.mxu0 %v214
        %500 = vmatprep.subr.mxu0 0.0
        %501 = vmatpush2.msra.mxu0 0.0
        %502 = vmatprep.subr.mxu0 0.0
        %503 = vmatpush2.msra.mxu0 0.0
        %504 = vmatprep.subr.mxu0 0.0
        %505 = vmatpush2.msra.mxu0 0.0
        %506 = vmatprep.subr.mxu0 0.0
        %507 = vmatpush2.msra.mxu0 0.0
        %508 = vmatprep.subr.mxu0 0.0
        %509 = vmatpush2.msra.mxu0 0.0
        %510 = vmatprep.subr.mxu0 0.0
        %511 = vmatpush2.msra.mxu0 0.0
        %512 = vmatprep.subr.mxu0 0.0
        %513 = vmatpush2.msra.mxu0 0.0
        %514 = vmatprep.subr.mxu0 0.0
        %515 = vmatpush2.msra.mxu0 0.0
        %516 = vmatprep.subr.mxu0 0.0
        %517 = vmatpush2.msra.mxu0 0.0
        %518 = vmatprep.subr.mxu0 0.0
        %519 = vmatpush2.msra.mxu0 0.0
        %520 = vmatprep.subr.mxu0 0.0
        %521 = vmatpush2.msra.mxu0 0.0
        %522 = vmatprep.subr.mxu0 0.0
        %523 = vmatpush2.msra.mxu0 0.0
        %524 = vmatprep.subr.mxu0 0.0
        %525 = vmatpush2.msra.mxu0 0.0
        %526 = vmatprep.subr.mxu0 0.0
        %527 = vmatpush2.msra.mxu0 0.0
        %528 = vmatprep.subr.mxu0 0.0
        %529 = vmatpush2.msra.mxu0 0.0
        %530 = vmatprep.subr.mxu0 0.0
        %531 = vmatpush2.msra.mxu0 0.0
        %532 = vmatprep.mubr.f32.mxu0 0.0
        %533 = vmatmul.mubr.f32.gmra.mxu0 %v463
        %v534 = vpop.f32.mrf.mxu0
        %v535 = vadd.f32 0.0, %v534
        %v536 = vpop.f32.mrf.mxu0
        %537 = vmatprep.mubr.f32.mxu0 0.0
        %538 = vmatmul.mubr.f32.gmra.mxu0 %v466
        %v539 = vpop.f32.mrf.mxu0
        %v540 = vadd.f32 0.0, %v539
        %v541 = vpop.f32.mrf.mxu0
        %542 = vdwg.mxu0
        %s543 = scalar_lea.vmem %s202, 16 [#allocation5]
        %544 = vst.msk [vmem:[%s543] sm:$0xff] %vm381, %v535
        %545 = vst.msk [vmem:[%s543 + $0x8] sm:$0xff] %vm381, %v540
        %s546 = scalar_lea.vmem [#allocation2], 32
        %v547 = vld [vmem:[%s546] sm:$0xff]
        %v548 = vld [vmem:[%s546 + $0x8] sm:$0xff]
        %549 = vmatprep.subr.mxu0 0.0
        %550 = vmatpush1.msra.mxu0 0.0
        %551 = vmatprep.subr.mxu0 0.0
        %552 = vmatpush1.msra.mxu0 0.0
        %553 = vmatprep.subr.mxu0 0.0
        %554 = vmatpush1.msra.mxu0 0.0
        %555 = vmatprep.subr.mxu0 0.0
        %556 = vmatpush1.msra.mxu0 0.0
        %557 = vmatprep.subr.mxu0 0.0
        %558 = vmatpush1.msra.mxu0 0.0
        %559 = vmatprep.subr.mxu0 0.0
        %560 = vmatpush1.msra.mxu0 0.0
        %561 = vmatprep.subr.mxu0 0.0
        %562 = vmatpush1.msra.mxu0 0.0
        %563 = vmatprep.subr.mxu0 0.0
        %564 = vmatpush1.msra.mxu0 0.0
        %565 = vmatprep.subr.mxu0 0.0
        %566 = vmatpush1.msra.mxu0 0.0
        %567 = vmatprep.subr.mxu0 0.0
        %568 = vmatpush1.msra.mxu0 0.0
        %569 = vmatprep.subr.mxu0 0.0
        %570 = vmatpush1.msra.mxu0 0.0
        %571 = vmatprep.subr.mxu0 0.0
        %572 = vmatpush1.msra.mxu0 0.0
        %573 = vmatprep.subr.mxu0 0.0
        %574 = vmatpush1.msra.mxu0 0.0
        %575 = vmatprep.subr.mxu0 0.0
        %576 = vmatpush1.msra.mxu0 0.0
        %577 = vmatprep.subr.mxu0 0.0
        %578 = vmatpush1.msra.mxu0 %v548
        %579 = vmatprep.subr.mxu0 0.0
        %580 = vmatpush1.msra.mxu0 %v547
        %581 = vmatprep.subr.mxu0 0.0
        %582 = vmatpush2.msra.mxu0 0.0
        %583 = vmatprep.subr.mxu0 0.0
        %584 = vmatpush2.msra.mxu0 0.0
        %585 = vmatprep.subr.mxu0 0.0
        %586 = vmatpush2.msra.mxu0 0.0
        %587 = vmatprep.subr.mxu0 0.0
        %588 = vmatpush2.msra.mxu0 0.0
        %589 = vmatprep.subr.mxu0 0.0
        %590 = vmatpush2.msra.mxu0 0.0
        %591 = vmatprep.subr.mxu0 0.0
        %592 = vmatpush2.msra.mxu0 0.0
        %593 = vmatprep.subr.mxu0 0.0
        %594 = vmatpush2.msra.mxu0 0.0
        %595 = vmatprep.subr.mxu0 0.0
        %596 = vmatpush2.msra.mxu0 0.0
        %597 = vmatprep.subr.mxu0 0.0
        %598 = vmatpush2.msra.mxu0 0.0
        %599 = vmatprep.subr.mxu0 0.0
        %600 = vmatpush2.msra.mxu0 0.0
        %601 = vmatprep.subr.mxu0 0.0
        %602 = vmatpush2.msra.mxu0 0.0
        %603 = vmatprep.subr.mxu0 0.0
        %604 = vmatpush2.msra.mxu0 0.0
        %605 = vmatprep.subr.mxu0 0.0
        %606 = vmatpush2.msra.mxu0 0.0
        %607 = vmatprep.subr.mxu0 0.0
        %608 = vmatpush2.msra.mxu0 0.0
        %609 = vmatprep.subr.mxu0 0.0
        %610 = vmatpush2.msra.mxu0 0.0
        %611 = vmatprep.subr.mxu0 0.0
        %612 = vmatpush2.msra.mxu0 0.0
        %613 = vmatprep.mubr.f32.mxu0 0.0
        %614 = vmatmul.mubr.f32.gmra.mxu0 %v220
        %v615 = vpop.f32.mrf.mxu0
        %v616 = vadd.f32 0.0, %v615
        %v617 = vpop.f32.mrf.mxu0
        %618 = vmatprep.mubr.f32.mxu0 0.0
        %619 = vmatmul.mubr.f32.gmra.mxu0 %v223
        %v620 = vpop.f32.mrf.mxu0
        %v621 = vadd.f32 0.0, %v620
        %v622 = vpop.f32.mrf.mxu0
        %623 = vdwg.mxu0
        %v625 = vsel %vm218, %v616, 0
        %v628 = vsel %vm218, %v621, 0
        %630 = vmatprep.subr.mxu0 0.0
        %631 = vmatpush1.msra.mxu0 0.0
        %632 = vmatprep.subr.mxu0 0.0
        %633 = vmatpush1.msra.mxu0 0.0
        %634 = vmatprep.subr.mxu0 0.0
        %635 = vmatpush1.msra.mxu0 0.0
        %636 = vmatprep.subr.mxu0 0.0
        %637 = vmatpush1.msra.mxu0 0.0
        %638 = vmatprep.subr.mxu0 0.0
        %639 = vmatpush1.msra.mxu0 0.0
        %640 = vmatprep.subr.mxu0 0.0
        %641 = vmatpush1.msra.mxu0 0.0
        %642 = vmatprep.subr.mxu0 0.0
        %643 = vmatpush1.msra.mxu0 0.0
        %644 = vmatprep.subr.mxu0 0.0
        %645 = vmatpush1.msra.mxu0 0.0
        %646 = vmatprep.subr.mxu0 0.0
        %647 = vmatpush1.msra.mxu0 0.0
        %648 = vmatprep.subr.mxu0 0.0
        %649 = vmatpush1.msra.mxu0 0.0
        %650 = vmatprep.subr.mxu0 0.0
        %651 = vmatpush1.msra.mxu0 0.0
        %652 = vmatprep.subr.mxu0 0.0
        %653 = vmatpush1.msra.mxu0 0.0
        %654 = vmatprep.subr.mxu0 0.0
        %655 = vmatpush1.msra.mxu0 0.0
        %656 = vmatprep.subr.mxu0 0.0
        %657 = vmatpush1.msra.mxu0 0.0
        %658 = vmatprep.subr.mxu0 0.0
        %659 = vmatpush1.msra.mxu0 %v215
        %660 = vmatprep.subr.mxu0 0.0
        %661 = vmatpush1.msra.mxu0 %v214
        %662 = vmatprep.subr.mxu0 0.0
        %663 = vmatpush2.msra.mxu0 0.0
        %664 = vmatprep.subr.mxu0 0.0
        %665 = vmatpush2.msra.mxu0 0.0
        %666 = vmatprep.subr.mxu0 0.0
        %667 = vmatpush2.msra.mxu0 0.0
        %668 = vmatprep.subr.mxu0 0.0
        %669 = vmatpush2.msra.mxu0 0.0
        %670 = vmatprep.subr.mxu0 0.0
        %671 = vmatpush2.msra.mxu0 0.0
        %672 = vmatprep.subr.mxu0 0.0
        %673 = vmatpush2.msra.mxu0 0.0
        %674 = vmatprep.subr.mxu0 0.0
        %675 = vmatpush2.msra.mxu0 0.0
        %676 = vmatprep.subr.mxu0 0.0
        %677 = vmatpush2.msra.mxu0 0.0
        %678 = vmatprep.subr.mxu0 0.0
        %679 = vmatpush2.msra.mxu0 0.0
        %680 = vmatprep.subr.mxu0 0.0
        %681 = vmatpush2.msra.mxu0 0.0
        %682 = vmatprep.subr.mxu0 0.0
        %683 = vmatpush2.msra.mxu0 0.0
        %684 = vmatprep.subr.mxu0 0.0
        %685 = vmatpush2.msra.mxu0 0.0
        %686 = vmatprep.subr.mxu0 0.0
        %687 = vmatpush2.msra.mxu0 0.0
        %688 = vmatprep.subr.mxu0 0.0
        %689 = vmatpush2.msra.mxu0 0.0
        %690 = vmatprep.subr.mxu0 0.0
        %691 = vmatpush2.msra.mxu0 0.0
        %692 = vmatprep.subr.mxu0 0.0
        %693 = vmatpush2.msra.mxu0 0.0
        %694 = vmatprep.mubr.f32.mxu0 0.0
        %695 = vmatmul.mubr.f32.gmra.mxu0 %v625
        %v696 = vpop.f32.mrf.mxu0
        %v697 = vadd.f32 0.0, %v696
        %v698 = vpop.f32.mrf.mxu0
        %699 = vmatprep.mubr.f32.mxu0 0.0
        %700 = vmatmul.mubr.f32.gmra.mxu0 %v628
        %v701 = vpop.f32.mrf.mxu0
        %v702 = vadd.f32 0.0, %v701
        %v703 = vpop.f32.mrf.mxu0
        %704 = vdwg.mxu0
        %s705 = scalar_lea.vmem %s202, 32 [#allocation5]
        %706 = vst.msk [vmem:[%s705] sm:$0xff] %vm381, %v697
        %707 = vst.msk [vmem:[%s705 + $0x8] sm:$0xff] %vm381, %v702
        %s708 = scalar_lea.vmem [#allocation2], 48
        %v709 = vld [vmem:[%s708] sm:$0xff]
        %v710 = vld [vmem:[%s708 + $0x8] sm:$0xff]
        %711 = vmatprep.subr.mxu0 0.0
        %712 = vmatpush1.msra.mxu0 0.0
        %713 = vmatprep.subr.mxu0 0.0
        %714 = vmatpush1.msra.mxu0 0.0
        %715 = vmatprep.subr.mxu0 0.0
        %716 = vmatpush1.msra.mxu0 0.0
        %717 = vmatprep.subr.mxu0 0.0
        %718 = vmatpush1.msra.mxu0 0.0
        %719 = vmatprep.subr.mxu0 0.0
        %720 = vmatpush1.msra.mxu0 0.0
        %721 = vmatprep.subr.mxu0 0.0
        %722 = vmatpush1.msra.mxu0 0.0
        %723 = vmatprep.subr.mxu0 0.0
        %724 = vmatpush1.msra.mxu0 0.0
        %725 = vmatprep.subr.mxu0 0.0
        %726 = vmatpush1.msra.mxu0 0.0
        %727 = vmatprep.subr.mxu0 0.0
        %728 = vmatpush1.msra.mxu0 0.0
        %729 = vmatprep.subr.mxu0 0.0
        %730 = vmatpush1.msra.mxu0 0.0
        %731 = vmatprep.subr.mxu0 0.0
        %732 = vmatpush1.msra.mxu0 0.0
        %733 = vmatprep.subr.mxu0 0.0
        %734 = vmatpush1.msra.mxu0 0.0
        %735 = vmatprep.subr.mxu0 0.0
        %736 = vmatpush1.msra.mxu0 0.0
        %737 = vmatprep.subr.mxu0 0.0
        %738 = vmatpush1.msra.mxu0 0.0
        %739 = vmatprep.subr.mxu0 0.0
        %740 = vmatpush1.msra.mxu0 %v710
        %741 = vmatprep.subr.mxu0 0.0
        %742 = vmatpush1.msra.mxu0 %v709
        %743 = vmatprep.subr.mxu0 0.0
        %744 = vmatpush2.msra.mxu0 0.0
        %745 = vmatprep.subr.mxu0 0.0
        %746 = vmatpush2.msra.mxu0 0.0
        %747 = vmatprep.subr.mxu0 0.0
        %748 = vmatpush2.msra.mxu0 0.0
        %749 = vmatprep.subr.mxu0 0.0
        %750 = vmatpush2.msra.mxu0 0.0
        %751 = vmatprep.subr.mxu0 0.0
        %752 = vmatpush2.msra.mxu0 0.0
        %753 = vmatprep.subr.mxu0 0.0
        %754 = vmatpush2.msra.mxu0 0.0
        %755 = vmatprep.subr.mxu0 0.0
        %756 = vmatpush2.msra.mxu0 0.0
        %757 = vmatprep.subr.mxu0 0.0
        %758 = vmatpush2.msra.mxu0 0.0
        %759 = vmatprep.subr.mxu0 0.0
        %760 = vmatpush2.msra.mxu0 0.0
        %761 = vmatprep.subr.mxu0 0.0
        %762 = vmatpush2.msra.mxu0 0.0
        %763 = vmatprep.subr.mxu0 0.0
        %764 = vmatpush2.msra.mxu0 0.0
        %765 = vmatprep.subr.mxu0 0.0
        %766 = vmatpush2.msra.mxu0 0.0
        %767 = vmatprep.subr.mxu0 0.0
        %768 = vmatpush2.msra.mxu0 0.0
        %769 = vmatprep.subr.mxu0 0.0
        %770 = vmatpush2.msra.mxu0 0.0
        %771 = vmatprep.subr.mxu0 0.0
        %772 = vmatpush2.msra.mxu0 0.0
        %773 = vmatprep.subr.mxu0 0.0
        %774 = vmatpush2.msra.mxu0 0.0
        %775 = vmatprep.mubr.f32.mxu0 0.0
        %776 = vmatmul.mubr.f32.gmra.mxu0 %v220
        %v777 = vpop.f32.mrf.mxu0
        %v778 = vadd.f32 0.0, %v777
        %v779 = vpop.f32.mrf.mxu0
        %780 = vmatprep.mubr.f32.mxu0 0.0
        %781 = vmatmul.mubr.f32.gmra.mxu0 %v223
        %v782 = vpop.f32.mrf.mxu0
        %v783 = vadd.f32 0.0, %v782
        %v784 = vpop.f32.mrf.mxu0
        %785 = vdwg.mxu0
        %v787 = vsel %vm218, %v778, 0
        %v790 = vsel %vm218, %v783, 0
        %792 = vmatprep.subr.mxu0 0.0
        %793 = vmatpush1.msra.mxu0 0.0
        %794 = vmatprep.subr.mxu0 0.0
        %795 = vmatpush1.msra.mxu0 0.0
        %796 = vmatprep.subr.mxu0 0.0
        %797 = vmatpush1.msra.mxu0 0.0
        %798 = vmatprep.subr.mxu0 0.0
        %799 = vmatpush1.msra.mxu0 0.0
        %800 = vmatprep.subr.mxu0 0.0
        %801 = vmatpush1.msra.mxu0 0.0
        %802 = vmatprep.subr.mxu0 0.0
        %803 = vmatpush1.msra.mxu0 0.0
        %804 = vmatprep.subr.mxu0 0.0
        %805 = vmatpush1.msra.mxu0 0.0
        %806 = vmatprep.subr.mxu0 0.0
        %807 = vmatpush1.msra.mxu0 0.0
        %808 = vmatprep.subr.mxu0 0.0
        %809 = vmatpush1.msra.mxu0 0.0
        %810 = vmatprep.subr.mxu0 0.0
        %811 = vmatpush1.msra.mxu0 0.0
        %812 = vmatprep.subr.mxu0 0.0
        %813 = vmatpush1.msra.mxu0 0.0
        %814 = vmatprep.subr.mxu0 0.0
        %815 = vmatpush1.msra.mxu0 0.0
        %816 = vmatprep.subr.mxu0 0.0
        %817 = vmatpush1.msra.mxu0 0.0
        %818 = vmatprep.subr.mxu0 0.0
        %819 = vmatpush1.msra.mxu0 0.0
        %820 = vmatprep.subr.mxu0 0.0
        %821 = vmatpush1.msra.mxu0 %v215
        %822 = vmatprep.subr.mxu0 0.0
        %823 = vmatpush1.msra.mxu0 %v214
        %824 = vmatprep.subr.mxu0 0.0
        %825 = vmatpush2.msra.mxu0 0.0
        %826 = vmatprep.subr.mxu0 0.0
        %827 = vmatpush2.msra.mxu0 0.0
        %828 = vmatprep.subr.mxu0 0.0
        %829 = vmatpush2.msra.mxu0 0.0
        %830 = vmatprep.subr.mxu0 0.0
        %831 = vmatpush2.msra.mxu0 0.0
        %832 = vmatprep.subr.mxu0 0.0
        %833 = vmatpush2.msra.mxu0 0.0
        %834 = vmatprep.subr.mxu0 0.0
        %835 = vmatpush2.msra.mxu0 0.0
        %836 = vmatprep.subr.mxu0 0.0
        %837 = vmatpush2.msra.mxu0 0.0
        %838 = vmatprep.subr.mxu0 0.0
        %839 = vmatpush2.msra.mxu0 0.0
        %840 = vmatprep.subr.mxu0 0.0
        %841 = vmatpush2.msra.mxu0 0.0
        %842 = vmatprep.subr.mxu0 0.0
        %843 = vmatpush2.msra.mxu0 0.0
        %844 = vmatprep.subr.mxu0 0.0
        %845 = vmatpush2.msra.mxu0 0.0
        %846 = vmatprep.subr.mxu0 0.0
        %847 = vmatpush2.msra.mxu0 0.0
        %848 = vmatprep.subr.mxu0 0.0
        %849 = vmatpush2.msra.mxu0 0.0
        %850 = vmatprep.subr.mxu0 0.0
        %851 = vmatpush2.msra.mxu0 0.0
        %852 = vmatprep.subr.mxu0 0.0
        %853 = vmatpush2.msra.mxu0 0.0
        %854 = vmatprep.subr.mxu0 0.0
        %855 = vmatpush2.msra.mxu0 0.0
        %856 = vmatprep.mubr.f32.mxu0 0.0
        %857 = vmatmul.mubr.f32.gmra.mxu0 %v787
        %v858 = vpop.f32.mrf.mxu0
        %v859 = vadd.f32 0.0, %v858
        %v860 = vpop.f32.mrf.mxu0
        %861 = vmatprep.mubr.f32.mxu0 0.0
        %862 = vmatmul.mubr.f32.gmra.mxu0 %v790
        %v863 = vpop.f32.mrf.mxu0
        %v864 = vadd.f32 0.0, %v863
        %v865 = vpop.f32.mrf.mxu0
        %866 = vdwg.mxu0
        %s867 = scalar_lea.vmem %s202, 48 [#allocation5]
        %868 = vst.msk [vmem:[%s867] sm:$0xff] %vm381, %v859
        %869 = vst.msk [vmem:[%s867 + $0x8] sm:$0xff] %vm381, %v864
        %s870 = scalar_lea.vmem [#allocation2], 64
        %v871 = vld [vmem:[%s870] sm:$0xff]
        %v872 = vld [vmem:[%s870 + $0x8] sm:$0xff]
        %873 = vmatprep.subr.mxu0 0.0
        %874 = vmatpush1.msra.mxu0 0.0
        %875 = vmatprep.subr.mxu0 0.0
        %876 = vmatpush1.msra.mxu0 0.0
        %877 = vmatprep.subr.mxu0 0.0
        %878 = vmatpush1.msra.mxu0 0.0
        %879 = vmatprep.subr.mxu0 0.0
        %880 = vmatpush1.msra.mxu0 0.0
        %881 = vmatprep.subr.mxu0 0.0
        %882 = vmatpush1.msra.mxu0 0.0
        %883 = vmatprep.subr.mxu0 0.0
        %884 = vmatpush1.msra.mxu0 0.0
        %885 = vmatprep.subr.mxu0 0.0
        %886 = vmatpush1.msra.mxu0 0.0
        %887 = vmatprep.subr.mxu0 0.0
        %888 = vmatpush1.msra.mxu0 0.0
        %889 = vmatprep.subr.mxu0 0.0
        %890 = vmatpush1.msra.mxu0 0.0
        %891 = vmatprep.subr.mxu0 0.0
        %892 = vmatpush1.msra.mxu0 0.0
        %893 = vmatprep.subr.mxu0 0.0
        %894 = vmatpush1.msra.mxu0 0.0
        %895 = vmatprep.subr.mxu0 0.0
        %896 = vmatpush1.msra.mxu0 0.0
        %897 = vmatprep.subr.mxu0 0.0
        %898 = vmatpush1.msra.mxu0 0.0
        %899 = vmatprep.subr.mxu0 0.0
        %900 = vmatpush1.msra.mxu0 0.0
        %901 = vmatprep.subr.mxu0 0.0
        %902 = vmatpush1.msra.mxu0 %v872
        %903 = vmatprep.subr.mxu0 0.0
        %904 = vmatpush1.msra.mxu0 %v871
        %905 = vmatprep.subr.mxu0 0.0
        %906 = vmatpush2.msra.mxu0 0.0
        %907 = vmatprep.subr.mxu0 0.0
        %908 = vmatpush2.msra.mxu0 0.0
        %909 = vmatprep.subr.mxu0 0.0
        %910 = vmatpush2.msra.mxu0 0.0
        %911 = vmatprep.subr.mxu0 0.0
        %912 = vmatpush2.msra.mxu0 0.0
        %913 = vmatprep.subr.mxu0 0.0
        %914 = vmatpush2.msra.mxu0 0.0
        %915 = vmatprep.subr.mxu0 0.0
        %916 = vmatpush2.msra.mxu0 0.0
        %917 = vmatprep.subr.mxu0 0.0
        %918 = vmatpush2.msra.mxu0 0.0
        %919 = vmatprep.subr.mxu0 0.0
        %920 = vmatpush2.msra.mxu0 0.0
        %921 = vmatprep.subr.mxu0 0.0
        %922 = vmatpush2.msra.mxu0 0.0
        %923 = vmatprep.subr.mxu0 0.0
        %924 = vmatpush2.msra.mxu0 0.0
        %925 = vmatprep.subr.mxu0 0.0
        %926 = vmatpush2.msra.mxu0 0.0
        %927 = vmatprep.subr.mxu0 0.0
        %928 = vmatpush2.msra.mxu0 0.0
        %929 = vmatprep.subr.mxu0 0.0
        %930 = vmatpush2.msra.mxu0 0.0
        %931 = vmatprep.subr.mxu0 0.0
        %932 = vmatpush2.msra.mxu0 0.0
        %933 = vmatprep.subr.mxu0 0.0
        %934 = vmatpush2.msra.mxu0 0.0
        %935 = vmatprep.subr.mxu0 0.0
        %936 = vmatpush2.msra.mxu0 0.0
        %937 = vmatprep.mubr.f32.mxu0 0.0
        %938 = vmatmul.mubr.f32.gmra.mxu0 %v220
        %v939 = vpop.f32.mrf.mxu0
        %v940 = vadd.f32 0.0, %v939
        %v941 = vpop.f32.mrf.mxu0
        %942 = vmatprep.mubr.f32.mxu0 0.0
        %943 = vmatmul.mubr.f32.gmra.mxu0 %v223
        %v944 = vpop.f32.mrf.mxu0
        %v945 = vadd.f32 0.0, %v944
        %v946 = vpop.f32.mrf.mxu0
        %947 = vdwg.mxu0
        %v949 = vsel %vm218, %v940, 0
        %v952 = vsel %vm218, %v945, 0
        %954 = vmatprep.subr.mxu0 0.0
        %955 = vmatpush1.msra.mxu0 0.0
        %956 = vmatprep.subr.mxu0 0.0
        %957 = vmatpush1.msra.mxu0 0.0
        %958 = vmatprep.subr.mxu0 0.0
        %959 = vmatpush1.msra.mxu0 0.0
        %960 = vmatprep.subr.mxu0 0.0
        %961 = vmatpush1.msra.mxu0 0.0
        %962 = vmatprep.subr.mxu0 0.0
        %963 = vmatpush1.msra.mxu0 0.0
        %964 = vmatprep.subr.mxu0 0.0
        %965 = vmatpush1.msra.mxu0 0.0
        %966 = vmatprep.subr.mxu0 0.0
        %967 = vmatpush1.msra.mxu0 0.0
        %968 = vmatprep.subr.mxu0 0.0
        %969 = vmatpush1.msra.mxu0 0.0
        %970 = vmatprep.subr.mxu0 0.0
        %971 = vmatpush1.msra.mxu0 0.0
        %972 = vmatprep.subr.mxu0 0.0
        %973 = vmatpush1.msra.mxu0 0.0
        %974 = vmatprep.subr.mxu0 0.0
        %975 = vmatpush1.msra.mxu0 0.0
        %976 = vmatprep.subr.mxu0 0.0
        %977 = vmatpush1.msra.mxu0 0.0
        %978 = vmatprep.subr.mxu0 0.0
        %979 = vmatpush1.msra.mxu0 0.0
        %980 = vmatprep.subr.mxu0 0.0
        %981 = vmatpush1.msra.mxu0 0.0
        %982 = vmatprep.subr.mxu0 0.0
        %983 = vmatpush1.msra.mxu0 %v215
        %984 = vmatprep.subr.mxu0 0.0
        %985 = vmatpush1.msra.mxu0 %v214
        %986 = vmatprep.subr.mxu0 0.0
        %987 = vmatpush2.msra.mxu0 0.0
        %988 = vmatprep.subr.mxu0 0.0
        %989 = vmatpush2.msra.mxu0 0.0
        %990 = vmatprep.subr.mxu0 0.0
        %991 = vmatpush2.msra.mxu0 0.0
        %992 = vmatprep.subr.mxu0 0.0
        %993 = vmatpush2.msra.mxu0 0.0
        %994 = vmatprep.subr.mxu0 0.0
        %995 = vmatpush2.msra.mxu0 0.0
        %996 = vmatprep.subr.mxu0 0.0
        %997 = vmatpush2.msra.mxu0 0.0
        %998 = vmatprep.subr.mxu0 0.0
        %999 = vmatpush2.msra.mxu0 0.0
        %1000 = vmatprep.subr.mxu0 0.0
        %1001 = vmatpush2.msra.mxu0 0.0
        %1002 = vmatprep.subr.mxu0 0.0
        %1003 = vmatpush2.msra.mxu0 0.0
        %1004 = vmatprep.subr.mxu0 0.0
        %1005 = vmatpush2.msra.mxu0 0.0
        %1006 = vmatprep.subr.mxu0 0.0
        %1007 = vmatpush2.msra.mxu0 0.0
        %1008 = vmatprep.subr.mxu0 0.0
        %1009 = vmatpush2.msra.mxu0 0.0
        %1010 = vmatprep.subr.mxu0 0.0
        %1011 = vmatpush2.msra.mxu0 0.0
        %1012 = vmatprep.subr.mxu0 0.0
        %1013 = vmatpush2.msra.mxu0 0.0
        %1014 = vmatprep.subr.mxu0 0.0
        %1015 = vmatpush2.msra.mxu0 0.0
        %1016 = vmatprep.subr.mxu0 0.0
        %1017 = vmatpush2.msra.mxu0 0.0
        %1018 = vmatprep.mubr.f32.mxu0 0.0
        %1019 = vmatmul.mubr.f32.gmra.mxu0 %v949
        %v1020 = vpop.f32.mrf.mxu0
        %v1021 = vadd.f32 0.0, %v1020
        %v1022 = vpop.f32.mrf.mxu0
        %1023 = vmatprep.mubr.f32.mxu0 0.0
        %1024 = vmatmul.mubr.f32.gmra.mxu0 %v952
        %v1025 = vpop.f32.mrf.mxu0
        %v1026 = vadd.f32 0.0, %v1025
        %v1027 = vpop.f32.mrf.mxu0
        %1028 = vdwg.mxu0
        %s1029 = scalar_lea.vmem %s202, 64 [#allocation5]
        %1030 = vst.msk [vmem:[%s1029] sm:$0xff] %vm381, %v1021
        %1031 = vst.msk [vmem:[%s1029 + $0x8] sm:$0xff] %vm381, %v1026
        %s1032 = scalar_lea.vmem [#allocation2], 80
        %v1033 = vld [vmem:[%s1032] sm:$0xff]
        %v1034 = vld [vmem:[%s1032 + $0x8] sm:$0xff]
        %1035 = vmatprep.subr.mxu0 0.0
        %1036 = vmatpush1.msra.mxu0 0.0
        %1037 = vmatprep.subr.mxu0 0.0
        %1038 = vmatpush1.msra.mxu0 0.0
        %1039 = vmatprep.subr.mxu0 0.0
        %1040 = vmatpush1.msra.mxu0 0.0
        %1041 = vmatprep.subr.mxu0 0.0
        %1042 = vmatpush1.msra.mxu0 0.0
        %1043 = vmatprep.subr.mxu0 0.0
        %1044 = vmatpush1.msra.mxu0 0.0
        %1045 = vmatprep.subr.mxu0 0.0
        %1046 = vmatpush1.msra.mxu0 0.0
        %1047 = vmatprep.subr.mxu0 0.0
        %1048 = vmatpush1.msra.mxu0 0.0
        %1049 = vmatprep.subr.mxu0 0.0
        %1050 = vmatpush1.msra.mxu0 0.0
        %1051 = vmatprep.subr.mxu0 0.0
        %1052 = vmatpush1.msra.mxu0 0.0
        %1053 = vmatprep.subr.mxu0 0.0
        %1054 = vmatpush1.msra.mxu0 0.0
        %1055 = vmatprep.subr.mxu0 0.0
        %1056 = vmatpush1.msra.mxu0 0.0
        %1057 = vmatprep.subr.mxu0 0.0
        %1058 = vmatpush1.msra.mxu0 0.0
        %1059 = vmatprep.subr.mxu0 0.0
        %1060 = vmatpush1.msra.mxu0 0.0
        %1061 = vmatprep.subr.mxu0 0.0
        %1062 = vmatpush1.msra.mxu0 0.0
        %1063 = vmatprep.subr.mxu0 0.0
        %1064 = vmatpush1.msra.mxu0 %v1034
        %1065 = vmatprep.subr.mxu0 0.0
        %1066 = vmatpush1.msra.mxu0 %v1033
        %1067 = vmatprep.subr.mxu0 0.0
        %1068 = vmatpush2.msra.mxu0 0.0
        %1069 = vmatprep.subr.mxu0 0.0
        %1070 = vmatpush2.msra.mxu0 0.0
        %1071 = vmatprep.subr.mxu0 0.0
        %1072 = vmatpush2.msra.mxu0 0.0
        %1073 = vmatprep.subr.mxu0 0.0
        %1074 = vmatpush2.msra.mxu0 0.0
        %1075 = vmatprep.subr.mxu0 0.0
        %1076 = vmatpush2.msra.mxu0 0.0
        %1077 = vmatprep.subr.mxu0 0.0
        %1078 = vmatpush2.msra.mxu0 0.0
        %1079 = vmatprep.subr.mxu0 0.0
        %1080 = vmatpush2.msra.mxu0 0.0
        %1081 = vmatprep.subr.mxu0 0.0
        %1082 = vmatpush2.msra.mxu0 0.0
        %1083 = vmatprep.subr.mxu0 0.0
        %1084 = vmatpush2.msra.mxu0 0.0
        %1085 = vmatprep.subr.mxu0 0.0
        %1086 = vmatpush2.msra.mxu0 0.0
        %1087 = vmatprep.subr.mxu0 0.0
        %1088 = vmatpush2.msra.mxu0 0.0
        %1089 = vmatprep.subr.mxu0 0.0
        %1090 = vmatpush2.msra.mxu0 0.0
        %1091 = vmatprep.subr.mxu0 0.0
        %1092 = vmatpush2.msra.mxu0 0.0
        %1093 = vmatprep.subr.mxu0 0.0
        %1094 = vmatpush2.msra.mxu0 0.0
        %1095 = vmatprep.subr.mxu0 0.0
        %1096 = vmatpush2.msra.mxu0 0.0
        %1097 = vmatprep.subr.mxu0 0.0
        %1098 = vmatpush2.msra.mxu0 0.0
        %1099 = vmatprep.mubr.f32.mxu0 0.0
        %1100 = vmatmul.mubr.f32.gmra.mxu0 %v220
        %v1101 = vpop.f32.mrf.mxu0
        %v1102 = vadd.f32 0.0, %v1101
        %v1103 = vpop.f32.mrf.mxu0
        %1104 = vmatprep.mubr.f32.mxu0 0.0
        %1105 = vmatmul.mubr.f32.gmra.mxu0 %v223
        %v1106 = vpop.f32.mrf.mxu0
        %v1107 = vadd.f32 0.0, %v1106
        %v1108 = vpop.f32.mrf.mxu0
        %1109 = vdwg.mxu0
        %v1111 = vsel %vm218, %v1102, 0
        %v1114 = vsel %vm218, %v1107, 0
        %1116 = vmatprep.subr.mxu0 0.0
        %1117 = vmatpush1.msra.mxu0 0.0
        %1118 = vmatprep.subr.mxu0 0.0
        %1119 = vmatpush1.msra.mxu0 0.0
        %1120 = vmatprep.subr.mxu0 0.0
        %1121 = vmatpush1.msra.mxu0 0.0
        %1122 = vmatprep.subr.mxu0 0.0
        %1123 = vmatpush1.msra.mxu0 0.0
        %1124 = vmatprep.subr.mxu0 0.0
        %1125 = vmatpush1.msra.mxu0 0.0
        %1126 = vmatprep.subr.mxu0 0.0
        %1127 = vmatpush1.msra.mxu0 0.0
        %1128 = vmatprep.subr.mxu0 0.0
        %1129 = vmatpush1.msra.mxu0 0.0
        %1130 = vmatprep.subr.mxu0 0.0
        %1131 = vmatpush1.msra.mxu0 0.0
        %1132 = vmatprep.subr.mxu0 0.0
        %1133 = vmatpush1.msra.mxu0 0.0
        %1134 = vmatprep.subr.mxu0 0.0
        %1135 = vmatpush1.msra.mxu0 0.0
        %1136 = vmatprep.subr.mxu0 0.0
        %1137 = vmatpush1.msra.mxu0 0.0
        %1138 = vmatprep.subr.mxu0 0.0
        %1139 = vmatpush1.msra.mxu0 0.0
        %1140 = vmatprep.subr.mxu0 0.0
        %1141 = vmatpush1.msra.mxu0 0.0
        %1142 = vmatprep.subr.mxu0 0.0
        %1143 = vmatpush1.msra.mxu0 0.0
        %1144 = vmatprep.subr.mxu0 0.0
        %1145 = vmatpush1.msra.mxu0 %v215
        %1146 = vmatprep.subr.mxu0 0.0
        %1147 = vmatpush1.msra.mxu0 %v214
        %1148 = vmatprep.subr.mxu0 0.0
        %1149 = vmatpush2.msra.mxu0 0.0
        %1150 = vmatprep.subr.mxu0 0.0
        %1151 = vmatpush2.msra.mxu0 0.0
        %1152 = vmatprep.subr.mxu0 0.0
        %1153 = vmatpush2.msra.mxu0 0.0
        %1154 = vmatprep.subr.mxu0 0.0
        %1155 = vmatpush2.msra.mxu0 0.0
        %1156 = vmatprep.subr.mxu0 0.0
        %1157 = vmatpush2.msra.mxu0 0.0
        %1158 = vmatprep.subr.mxu0 0.0
        %1159 = vmatpush2.msra.mxu0 0.0
        %1160 = vmatprep.subr.mxu0 0.0
        %1161 = vmatpush2.msra.mxu0 0.0
        %1162 = vmatprep.subr.mxu0 0.0
        %1163 = vmatpush2.msra.mxu0 0.0
        %1164 = vmatprep.subr.mxu0 0.0
        %1165 = vmatpush2.msra.mxu0 0.0
        %1166 = vmatprep.subr.mxu0 0.0
        %1167 = vmatpush2.msra.mxu0 0.0
        %1168 = vmatprep.subr.mxu0 0.0
        %1169 = vmatpush2.msra.mxu0 0.0
        %1170 = vmatprep.subr.mxu0 0.0
        %1171 = vmatpush2.msra.mxu0 0.0
        %1172 = vmatprep.subr.mxu0 0.0
        %1173 = vmatpush2.msra.mxu0 0.0
        %1174 = vmatprep.subr.mxu0 0.0
        %1175 = vmatpush2.msra.mxu0 0.0
        %1176 = vmatprep.subr.mxu0 0.0
        %1177 = vmatpush2.msra.mxu0 0.0
        %1178 = vmatprep.subr.mxu0 0.0
        %1179 = vmatpush2.msra.mxu0 0.0
        %1180 = vmatprep.mubr.f32.mxu0 0.0
        %1181 = vmatmul.mubr.f32.gmra.mxu0 %v1111
        %v1182 = vpop.f32.mrf.mxu0
        %v1183 = vadd.f32 0.0, %v1182
        %v1184 = vpop.f32.mrf.mxu0
        %1185 = vmatprep.mubr.f32.mxu0 0.0
        %1186 = vmatmul.mubr.f32.gmra.mxu0 %v1114
        %v1187 = vpop.f32.mrf.mxu0
        %v1188 = vadd.f32 0.0, %v1187
        %v1189 = vpop.f32.mrf.mxu0
        %1190 = vdwg.mxu0
        %s1191 = scalar_lea.vmem %s202, 80 [#allocation5]
        %1192 = vst.msk [vmem:[%s1191] sm:$0xff] %vm381, %v1183
        %1193 = vst.msk [vmem:[%s1191 + $0x8] sm:$0xff] %vm381, %v1188
        %s1194 = sand.u32 %s113, 1
        %s1195 = scalar_lea.sflag [#allocation4], %s1194
        %s1196 = sand.u32 %s113, 1
        %s1197 = smul.addr %s1196, 96
        %s1198 = scalar_lea.vmem [#allocation5], %s1197
        // Predicated region
        $region37: #{tpu_custom_call.1} parent=31 // pred_check
          %p1199 = pneg %p123
        $region38: #{tpu_custom_call.1} parent=31 // pred_check_branch
          %1201 = sbr.rel (%p1199) target = $region40
        $region39: #{tpu_custom_call.1} parent=31 // pred_region
          #allocation7 [shape = 'u32[6]{0}', space=smem, size = 0x18, scoped, tag = 'DMA stride descriptor']
          %s1202 = smul.u32 6, %s22
          %s1203 = smul.u32 2, %s23
          %s1205 = ssub.s32 1536, 1536
          %1206 = vsyncadd %s1195, %s1205
          %s1207 = smul.addr %s1202, 8
          %s1208 = sadd.s32 %s1203, %s1207
          %s1209 = smul.addr %s1208, 128
          %s1210 = scalar_lea.hbm %s3, %s1209
          %s1212 = sshll.u32 1, 14
          %s1213 = sxor.u32 4294967295, %s1212
          %s1216 = sshll.u32 7, 18
          %s1217 = sxor.u32 4294967295, %s1216
          %s1218 = sand.u32 0, %s1217
          %s1220 = sor.u32 %s1218, 0
          %s1221 = sshll.u32 %s1198, 4
          %s1222 = int_to_ptr.vmem [resolvable:$true] %s1221
          %1228 = sst [smem:[#allocation7]] 256
          %s1229 = scalar_lea.smem [#allocation7], 1
          %1230 = sst [smem:[%s1229]] 1024
          %s1231 = scalar_lea.smem [#allocation7], 2
          %1232 = sst [smem:[%s1231]] 2
          %s1233 = scalar_lea.smem [#allocation7], 3
          %1234 = sst [smem:[%s1233]] 128
          %s1235 = scalar_lea.smem [#allocation7], 4
          %1236 = sst [smem:[%s1235]] 128
          %s1237 = scalar_lea.smem [#allocation7], 5
          %1238 = sst [smem:[%s1237]] 8
          %1240 = dma.general %s1222, 1536, %s1210, %s1195, 131072, [#allocation7], %s1220, 0
        $region40: #{tpu_custom_call.1} parent=31 // pred_fallthru
          _
      $region32: #{tpu_custom_call.1} parent=5 // pred_fallthru
        _
      %p1241 = scmp.le.s32.totalorder 2, %s13
      // Predicated region
      $region41: #{tpu_custom_call.1} parent=5 // pred_check
        %p1242 = pneg %p1241
      $region42: #{tpu_custom_call.1} parent=5 // pred_check_branch
        %1244 = sbr.rel (%p1242) target = $region44
      $region43: #{tpu_custom_call.1} parent=5 // pred_region
        %s1245 = ssub.s32 %s13, 2
        // Predicated region
        $region45: #{tpu_custom_call.1} parent=43 // pred_check
          %p1246 = pneg %p129
        $region46: #{tpu_custom_call.1} parent=43 // pred_check_branch
          %1248 = sbr.rel (%p1246) target = $region48
        $region47: #{tpu_custom_call.1} parent=43 // pred_region
          %s1249 = sand.u32 %s114, 1
          %s1250 = scalar_lea.sflag [#allocation4], %s1249
          %s1251 = sand.u32 %s114, 1
          %s1252 = smul.addr %s1251, 96
          %s1253 = scalar_lea.vmem [#allocation5], %s1252
          %1254 = dma.done %s1250, 1536
        $region48: #{tpu_custom_call.1} parent=43 // pred_fallthru
          _
      $region44: #{tpu_custom_call.1} parent=5 // pred_fallthru
        _
    $region6: #{tpu_custom_call.1} parent=1 // loop_footer
      %s17 = sadd.s32 1, %s13
    $region7: #{tpu_custom_call.1} parent=1 // loop_footer_branch
      %12 = sbr.rel target = $region3
    $region8: #{tpu_custom_call.1} parent=1 // loop_exit
      _
    %1255 = vsyncpa [#allocation3], 1
    %s1256 = scalar_lea.sflag [#allocation3], 1
    %1257 = vsyncpa %s1256, 1
    %1258 = vsyncpa [#allocation4], 1
    %s1259 = scalar_lea.sflag [#allocation4], 1
    %1260 = vsyncpa %s1259, 1

</llo_original>
